<compile_context>
chip_gen: v7x
topology: tpu7x:2x2x1
jax: 0.10.0
libtpu: 0.0.40
codegen_flags: <defaults>
</compile_context>

<pallas_src>
import functools

import jax
import jax.numpy as jnp
from jax.experimental import pallas as pl
from jax.experimental.pallas import tpu as pltpu


# ----------------------------------------------------------------------------
# Kernel 1: pairwise squared distances  d = |q|^2 + |p|^2 - 2 q.p  (lane-dense in N)
# ----------------------------------------------------------------------------
def _sqdist_kernel(q_ref, pt_ref, d_ref):
    # q_ref: (M, 3), pt_ref: (3, N), d_ref: (M, N)
    q = q_ref[...]
    pt = pt_ref[...]
    qq = jnp.sum(q * q, axis=-1, keepdims=True)        # (M, 1)
    pp = jnp.sum(pt * pt, axis=0, keepdims=True)       # (1, N)
    # contraction depth is only 3 -> exact-f32 VPU broadcast-FMAs, lane-dense result
    cross = (q[:, 0:1] * pt[0:1, :]
             + q[:, 1:2] * pt[1:2, :]
             + q[:, 2:3] * pt[2:3, :])                 # (M, N)
    d_ref[...] = jnp.maximum(qq + pp - 2.0 * cross, 0.0)


def pairwise_sqdist(new_xyz, xyz):
    b, m, _ = new_xyz.shape
    _, n, _ = xyz.shape
    xyz_t = jnp.transpose(xyz, (0, 2, 1)).astype(jnp.float32)   # (B, 3, N)
    return pl.pallas_call(
        _sqdist_kernel,
        out_shape=jax.ShapeDtypeStruct((b, m, n), jnp.float32),
        grid=(b,),
        in_specs=[
            pl.BlockSpec((None, m, 3), lambda i: (i, 0, 0)),
            pl.BlockSpec((None, 3, n), lambda i: (i, 0, 0)),
        ],
        out_specs=pl.BlockSpec((None, m, n), lambda i: (i, 0, 0)),
        compiler_params=pltpu.CompilerParams(dimension_semantics=("parallel",)),
    )(new_xyz.astype(jnp.float32), xyz_t)


# ----------------------------------------------------------------------------
# Kernel 2: edge-feature MLP (1x1 conv + folded BN + ReLU, x2) + max over K, fused
# ----------------------------------------------------------------------------
def _edge_mlp_kernel(knn_ref, newf_ref, w1a_ref, w1d_ref, b1_ref,
                     w2_ref, b2_ref, out_ref, *, k, bm):
    # knn_ref : (K*bm, C)  bf16  -- K-major within the M tile (row = j*bm + i)
    # newf_ref: (bm, C)    bf16  -- center (query) features
    # w1a     : (C, H1)    bf16  -- s1-folded weight acting on the neighbour feature
    # w1d     : (C, H1)    bf16  -- s1-folded (W1_center - W1_neighbour)
    # b1      : (1, H1)    f32
    # w2      : (H1, H2)   bf16  -- s2-folded
    # b2      : (1, H2)    f32
    # out_ref : (bm, H2)   f32   -- max over the K neighbours
    #
    # concat([knn - newf, newf]) @ W1  ==  knn @ W1a + newf @ (W1b - W1a)
    center = jnp.dot(newf_ref[...], w1d_ref[...],
                     preferred_element_type=jnp.float32) + b1_ref[...]   # (bm, H1)
    center_k = jnp.concatenate([center] * k, axis=0)                     # (K*bm, H1)

    h = jnp.dot(knn_ref[...], w1a_ref[...],
                preferred_element_type=jnp.float32)                      # (K*bm, H1)
    h = jnp.maximum(h + center_k, 0.0)                                   # conv1 + BN + ReLU

    h = jnp.dot(h.astype(jnp.bfloat16), w2_ref[...],
                preferred_element_type=jnp.float32)                      # (K*bm, H2)
    h = jnp.maximum(h + b2_ref[...], 0.0)                                # conv2 + BN + ReLU

    out = h[0:bm]
    for j in range(1, k):                       # static: one elementwise max per neighbour
        out = jnp.maximum(out, h[j * bm:(j + 1) * bm])
    out_ref[...] = out


def edge_mlp_max(knn_flat, newf_cat, folded_params, *, nsample, block_m):
    b, mk, c = knn_flat.shape
    m = mk // nsample
    w1a, w1d, b1, w2, b2 = folded_params
    h1 = w1a.shape[1]
    h2 = w2.shape[1]
    kern = functools.partial(_edge_mlp_kernel, k=nsample, bm=block_m)
    return pl.pallas_call(
        kern,
        out_shape=jax.ShapeDtypeStruct((b, m, h2), jnp.float32),
        grid=(b, m // block_m),
        in_specs=[
            pl.BlockSpec((None, block_m * nsample, c), lambda i, j: (i, j, 0)),
            pl.BlockSpec((None, block_m, c), lambda i, j: (i, j, 0)),
            pl.BlockSpec((c, h1), lambda i, j: (0, 0)),     # weights stay resident
            pl.BlockSpec((c, h1), lambda i, j: (0, 0)),
            pl.BlockSpec((1, h1), lambda i, j: (0, 0)),
            pl.BlockSpec((h1, h2), lambda i, j: (0, 0)),
            pl.BlockSpec((1, h2), lambda i, j: (0, 0)),
        ],
        out_specs=pl.BlockSpec((None, block_m, h2), lambda i, j: (i, j, 0)),
        compiler_params=pltpu.CompilerParams(
            dimension_semantics=("parallel", "parallel"),
            vmem_limit_bytes=64 * 1024 * 1024),
    )(knn_flat, newf_cat, w1a, w1d, b1, w2, b2)


# ----------------------------------------------------------------------------
# Glue: Range sampling, knn top-k, gather into kernel layout, param folding
# ----------------------------------------------------------------------------
def _choose_block_m(m, target=256):
    bm = min(m, target)
    while m % bm:
        bm -= 1
    return bm


def _fold_params(params, c):
    """Fold BN scale into conv weights; split layer-1 weight for the center-term trick."""
    w1, s1, b1, w2, s2, b2 = params
    w1s = (w1 * s1).astype(jnp.float32)          # (2C, H1), s1 per output channel
    w2s = (w2 * s2).astype(jnp.float32)          # (H1, H2)
    w1a = w1s[:c]                                # acts on the neighbour feature
    w1d = w1s[c:] - w1s[:c]                      # acts on the center feature
    return (w1a.astype(jnp.bfloat16), w1d.astype(jnp.bfloat16),
            b1.astype(jnp.float32),
            w2s.astype(jnp.bfloat16), b2.astype(jnp.float32))


def edge_conv_forward(xyz, feat, npoints, nsample, params, use_xyz=True):
    """xyz: (B, N, 3) float32; feat: (B, Cf, N) float32 (PyTorch layout)."""
    b, n, _ = xyz.shape
    # sample_method == 'Range'
    sample_idx = jnp.broadcast_to(jnp.arange(npoints, dtype=jnp.int32), (b, npoints))
    new_xyz = xyz[:, :npoints, :]                                   # (B, M, 3)
    feat_t = jnp.transpose(feat, (0, 2, 1))                         # (B, N, Cf)
    new_feat_t = feat_t[:, :npoints, :]                             # (B, M, Cf)
    if use_xyz:
        feat_cat = jnp.concatenate([feat_t, xyz], axis=-1)          # (B, N, C)
        newf_cat = jnp.concatenate([new_feat_t, new_xyz], axis=-1)  # (B, M, C)
    else:
        feat_cat, newf_cat = feat_t, new_feat_t
    c = feat_cat.shape[-1]

    dist = pairwise_sqdist(new_xyz, xyz)                            # (B, M, N)   [Pallas]
    _, knn_idx = jax.lax.top_k(-dist, nsample)                      # (B, M, K) smallest dists

    block_m = _choose_block_m(npoints)
    # Gather directly into the tile-local K-major flat layout (row = j*block_m + i inside
    # each M tile) so the edge kernel needs no in-kernel reshapes; gather in bf16 to
    # halve HBM traffic of the dominant operand.
    kidx = knn_idx.reshape(b, npoints // block_m, block_m, nsample)
    kidx = jnp.transpose(kidx, (0, 1, 3, 2)).reshape(b, npoints * nsample)
    feat_cat_bf = feat_cat.astype(jnp.bfloat16)
    knn_flat = jax.vmap(lambda f, i: f[i])(feat_cat_bf, kidx)       # (B, M*K, C) bf16

    folded = _fold_params(params, c)
    new_feat = edge_mlp_max(knn_flat, newf_cat.astype(jnp.bfloat16), folded,
                            nsample=nsample, block_m=block_m)       # (B, M, H2)  [Pallas]
    new_feat = jnp.transpose(new_feat, (0, 2, 1))                   # (B, H2, M)  PyTorch layout
    # PyTorch returns sample_idx.long(); int32 here (JAX x64 disabled by default)
    return new_xyz, new_feat, sample_idx


if __name__ == "__main__":
    # Small, module-consistent shapes.
    B, N, Cf = 2, 16, 4          # batch, num points, feature channels
    NPOINTS, K = 8, 4            # sampled points, nsample (k-NN)
    H1, H2 = 16, 32              # cfg.mlps = [Cf, H1, H2] -> in = 2*Cf + 6 (use_xyz)
    Cin = 2 * Cf + 6

    key = jax.random.PRNGKey(0)
    kx, kf, k1, k2, ks1, kb1, ks2, kb2 = jax.random.split(key, 8)
    xyz = jax.random.normal(kx, (B, N, 3), jnp.float32)
    feat = jax.random.normal(kf, (B, Cf, N), jnp.float32)

    # Conv2d(1x1) weights stored as (in, out); BatchNorm2d (eval) folded into scale/bias.
    w1 = 0.2 * jax.random.normal(k1, (Cin, H1), jnp.float32)
    w2 = 0.2 * jax.random.normal(k2, (H1, H2), jnp.float32)
    s1 = 1.0 + 0.1 * jax.random.normal(ks1, (1, H1), jnp.float32)
    b1 = 0.1 * jax.random.normal(kb1, (1, H1), jnp.float32)
    s2 = 1.0 + 0.1 * jax.random.normal(ks2, (1, H2), jnp.float32)
    b2 = 0.1 * jax.random.normal(kb2, (1, H2), jnp.float32)
    params = (w1, s1, b1, w2, s2, b2)

    new_xyz, new_feat, sample_idx = jax.block_until_ready(
        edge_conv_forward(xyz, feat, NPOINTS, K, params, use_xyz=True))

    assert new_xyz.shape == (B, NPOINTS, 3)
    assert new_feat.shape == (B, H2, NPOINTS)
    assert sample_idx.shape == (B, NPOINTS)

    # ---- pure-JAX (f32) reference checks for the Pallas hot paths ----
    feat_t = jnp.transpose(feat, (0, 2, 1))
    feat_cat = jnp.concatenate([feat_t, xyz], axis=-1)
    new_xyz_r = xyz[:, :NPOINTS, :]
    newf_cat = jnp.concatenate([feat_t[:, :NPOINTS, :], new_xyz_r], axis=-1)

    diff = new_xyz_r[:, :, None, :] - xyz[:, None, :, :]
    dist_ref = jnp.sum(diff * diff, axis=-1)
    dist_pl = pairwise_sqdist(new_xyz_r, xyz)
    assert jnp.allclose(dist_pl, dist_ref, atol=1e-4, rtol=1e-4)

    # Use the Pallas distances for top-k in the reference too (avoids tie-break mismatch).
    _, knn_idx = jax.lax.top_k(-dist_pl, K)
    knn_feat = jax.vmap(lambda f, i: f[i])(feat_cat, knn_idx)          # (B, M, K, C)
    tiled = jnp.broadcast_to(newf_cat[:, :, None, :], knn_feat.shape)
    edge = jnp.concatenate([knn_feat - tiled, tiled], axis=-1)         # (B, M, K, 2C)
    h = jnp.maximum(jnp.einsum('bmkc,ch->bmkh', edge, w1) * s1 + b1, 0.0)
    h = jnp.maximum(jnp.einsum('bmkh,hj->bmkj', h, w2) * s2 + b2, 0.0)
    ref_feat = jnp.transpose(jnp.max(h, axis=2), (0, 2, 1))            # (B, H2, M)
    # Kernel uses bf16 matmul operands with f32 accumulation -> looser tolerance.
    assert jnp.allclose(new_feat, ref_feat, atol=5e-2, rtol=5e-2)

    print("KERNEL_OK")
</pallas_src>

<mosaic_0001>
module attributes {stable_mosaic.version = 11 : i64} {
  func.func @_sqdist_kernel(%arg0: i32, %arg1: memref<1x8x3xf32, #tpu.memory_space<vmem>>, %arg2: memref<1x3x16xf32, #tpu.memory_space<vmem>>, %arg3: memref<1x8x16xf32, #tpu.memory_space<vmem>>) attributes {dimension_semantics = [#tpu.dimension_semantics<parallel>], iteration_bounds = array<i64: 2>, scalar_prefetch = 0 : i64, scratch_operands = 0 : i64, tpu.core_type = #tpu.core_type<tc>, window_params = [{transform_indices = @transform_0, window_bounds = array<i64: 1, 8, 3>}, {transform_indices = @transform_1, window_bounds = array<i64: 1, 3, 16>}, {transform_indices = @transform_2, window_bounds = array<i64: 1, 8, 16>}]} {
    %c0 = arith.constant 0 : index
    %c0_0 = arith.constant 0 : index
    %c0_1 = arith.constant 0 : index
    %0 = vector.load %arg1[%c0, %c0_0, %c0_1] : memref<1x8x3xf32, #tpu.memory_space<vmem>>, vector<1x8x3xf32>
    %1 = vector.shape_cast %0 : vector<1x8x3xf32> to vector<8x3xf32>
    %c0_2 = arith.constant 0 : index
    %c0_3 = arith.constant 0 : index
    %c0_4 = arith.constant 0 : index
    %2 = vector.load %arg2[%c0_2, %c0_3, %c0_4] : memref<1x3x16xf32, #tpu.memory_space<vmem>>, vector<1x3x16xf32>
    %3 = vector.shape_cast %2 : vector<1x3x16xf32> to vector<3x16xf32>
    %4 = arith.mulf %1, %1 : vector<8x3xf32>
    %cst = arith.constant dense<0.000000e+00> : vector<8xf32>
    %5 = vector.multi_reduction <add>, %4, %cst [1] : vector<8x3xf32> to vector<8xf32>
    %6 = vector.shape_cast %5 : vector<8xf32> to vector<8x1xf32>
    %7 = arith.mulf %3, %3 : vector<3x16xf32>
    %cst_5 = arith.constant dense<0.000000e+00> : vector<16xf32>
    %8 = vector.multi_reduction <add>, %7, %cst_5 [0] : vector<3x16xf32> to vector<16xf32>
    %9 = vector.shape_cast %8 : vector<16xf32> to vector<1x16xf32>
    %10 = vector.extract_strided_slice %1 {offsets = [0, 0], sizes = [8, 1], strides = [1, 1]} : vector<8x3xf32> to vector<8x1xf32>
    %11 = vector.extract_strided_slice %3 {offsets = [0, 0], sizes = [1, 16], strides = [1, 1]} : vector<3x16xf32> to vector<1x16xf32>
    %12 = vector.broadcast %10 : vector<8x1xf32> to vector<8x16xf32>
    %13 = vector.broadcast %11 : vector<1x16xf32> to vector<8x16xf32>
    %14 = arith.mulf %12, %13 : vector<8x16xf32>
    %15 = vector.extract_strided_slice %1 {offsets = [0, 1], sizes = [8, 1], strides = [1, 1]} : vector<8x3xf32> to vector<8x1xf32>
    %16 = vector.extract_strided_slice %3 {offsets = [1, 0], sizes = [1, 16], strides = [1, 1]} : vector<3x16xf32> to vector<1x16xf32>
    %17 = vector.broadcast %15 : vector<8x1xf32> to vector<8x16xf32>
    %18 = vector.broadcast %16 : vector<1x16xf32> to vector<8x16xf32>
    %19 = arith.mulf %17, %18 : vector<8x16xf32>
    %20 = arith.addf %14, %19 : vector<8x16xf32>
    %21 = vector.extract_strided_slice %1 {offsets = [0, 2], sizes = [8, 1], strides = [1, 1]} : vector<8x3xf32> to vector<8x1xf32>
    %22 = vector.extract_strided_slice %3 {offsets = [2, 0], sizes = [1, 16], strides = [1, 1]} : vector<3x16xf32> to vector<1x16xf32>
    %23 = vector.broadcast %21 : vector<8x1xf32> to vector<8x16xf32>
    %24 = vector.broadcast %22 : vector<1x16xf32> to vector<8x16xf32>
    %25 = arith.mulf %23, %24 : vector<8x16xf32>
    %26 = arith.addf %20, %25 : vector<8x16xf32>
    %27 = vector.broadcast %6 : vector<8x1xf32> to vector<8x16xf32>
    %28 = vector.broadcast %9 : vector<1x16xf32> to vector<8x16xf32>
    %29 = arith.addf %27, %28 : vector<8x16xf32>
    %cst_6 = arith.constant 2.000000e+00 : f32
    %30 = vector.broadcast %cst_6 : f32 to vector<8x16xf32>
    %31 = arith.mulf %30, %26 : vector<8x16xf32>
    %32 = arith.subf %29, %31 : vector<8x16xf32>
    %cst_7 = arith.constant 0.000000e+00 : f32
    %33 = vector.broadcast %cst_7 : f32 to vector<8x16xf32>
    %34 = arith.maximumf %32, %33 : vector<8x16xf32>
    %c0_8 = arith.constant 0 : index
    %c0_9 = arith.constant 0 : index
    %c0_10 = arith.constant 0 : index
    %35 = vector.load %arg3[%c0_8, %c0_9, %c0_10] : memref<1x8x16xf32, #tpu.memory_space<vmem>>, vector<1x8x16xf32>
    %36 = vector.shape_cast %35 : vector<1x8x16xf32> to vector<8x16xf32>
    %37 = vector.shape_cast %34 : vector<8x16xf32> to vector<1x8x16xf32>
    tpu.vector_store %arg3[%c0_8, %c0_9, %c0_10], %37 {strides = array<i32>} : memref<1x8x16xf32, #tpu.memory_space<vmem>>, vector<1x8x16xf32>,
    return
  }
  func.func @transform_0(%arg0: i32) -> (i32, i32, i32) {
    %c0_i32 = arith.constant 0 : i32
    %c0_i32_0 = arith.constant 0 : i32
    %c0_i32_1 = arith.constant 0 : i32
    return %arg0, %c0_i32, %c0_i32_0 : i32, i32, i32
  }
  func.func @transform_1(%arg0: i32) -> (i32, i32, i32) {
    %c0_i32 = arith.constant 0 : i32
    %c0_i32_0 = arith.constant 0 : i32
    %c0_i32_1 = arith.constant 0 : i32
    return %arg0, %c0_i32, %c0_i32_0 : i32, i32, i32
  }
  func.func @transform_2(%arg0: i32) -> (i32, i32, i32) {
    %c0_i32 = arith.constant 0 : i32
    %c0_i32_0 = arith.constant 0 : i32
    %c0_i32_1 = arith.constant 0 : i32
    return %arg0, %c0_i32, %c0_i32_0 : i32, i32, i32
  }
}

</mosaic_0001>

<llo_original>
// kernel: tpu_custom_call.1
$region0: #{tpu_custom_call.1}
  #allocation0 [shape = 'u32[]', space=smem, size = 0x4, offset = 0x4, fixed_abs, tag = 'smem constant byte address 0x4 - core index']
  #allocation1 [shape = 'u32[144,128]{1,0:T(1,128)}', space=vmem, size = 0x12000, scoped, tag = 'internal scratch']
  %s0 = inlined_call_operand.vmem [shape: f32[2,8,3], index: 0, kind: input, shape index: {}]
  %s1 = inlined_call_operand.vmem [shape: f32[2,3,16], index: 1, kind: input, shape index: {}]
  %s2 = inlined_call_operand.hbm [shape: f32[2,8,16], index: 2, kind: output, shape index: {}]
  %s3 = sld [smem:[#allocation0]]
  $region41: #{tpu_custom_call.1} parent=0
    _
  %s5 = ssub.s32 1, %s3
  %s6 = scalar_select 0, %s5, %s3
  $region1: #{tpu_custom_call.1} parent=0
    #allocation2 [shape = 'u8[8192]{0}', space=vmem, size = 0x2000, scoped, tag = 'output window, operand 0']
    #allocation3 [shape = 's32[2]{0}', space=sflag, size = 0x8, scoped, tag = 'scoped memory for tpu_custom_call.1']
    %7 = vsyncpa [#allocation3], 0
    %s8 = scalar_lea.sflag [#allocation3], 1
    %9 = vsyncpa %s8, 0
    loop: start=0, step=1, limit=4
    $region2: #{tpu_custom_call.1} parent=1 // loop_pre_header
      _
    $region3: #{tpu_custom_call.1} parent=1 // loop_header
      %s11 = sphi 0, %s15
      %p12 = scmp.ge.s32.totalorder %s11, 4
      %s21 = sphi 0, %s23
      %s24 = sphi 0, %s21
      %s25 = sphi 0, %s24
      %s41 = sphi 0, %s25
      %s47 = sphi 0, %s49
      %s50 = sphi 0, %s47
      %s51 = sphi 0, %s50
      %s67 = sphi 0, %s51
      %s73 = sphi 0, %s75
      %s76 = sphi 0, %s73
      %s77 = sphi 0, %s76
      %s93 = sphi 0, %s77
    $region4: #{tpu_custom_call.1} parent=1 // loop_header_branch
      %14 = sbr.rel (%p12) target = $region8
    $region5: #{tpu_custom_call.1} parent=1 // loop_body
      %s16 = ssub.s32 %s11, 1
      %s17 = ssub.s32 %s11, 2
      %s18 = sadd.s32 %s11, 1
      %s19 = ssub.s32 %s11, %s18
      %p20 = scmp.eq.s32.totalorder %s19, 0
      %s22 = sadd.s32 %s21, 1
      %s23 = scalar_select %p20, %s21, %s22
      %p26 = pneg %p20
      %p27 = scmp.eq.s32.totalorder %s11, 1
      %p28 = por %p26, %p27
      %p29 = scmp.ne.s32.totalorder %s21, %s24
      %p30 = scmp.eq.s32.totalorder %s11, 0
      %p31 = por %p29, %p30
      %p32 = scmp.ne.s32.totalorder %s21, %s24
      %p33 = scmp.eq.s32.totalorder %s16, 1
      %p34 = por %p32, %p33
      %p35 = scmp.ne.s32.totalorder %s24, %s25
      %p36 = scmp.eq.s32.totalorder %s16, 0
      %p37 = por %p35, %p36
      %p38 = scmp.ne.s32.totalorder %s24, %s25
      %p39 = scmp.eq.s32.totalorder %s17, 1
      %p40 = por %p38, %p39
      %p42 = scmp.ne.s32.totalorder %s25, %s41
      %p43 = scmp.eq.s32.totalorder %s17, 0
      %p44 = por %p42, %p43
      %s45 = ssub.s32 %s11, %s18
      %p46 = scmp.eq.s32.totalorder %s45, 0
      %s48 = sadd.s32 %s47, 1
      %s49 = scalar_select %p46, %s47, %s48
      %p52 = pneg %p46
      %p53 = scmp.eq.s32.totalorder %s11, 1
      %p54 = por %p52, %p53
      %p55 = scmp.ne.s32.totalorder %s47, %s50
      %p56 = scmp.eq.s32.totalorder %s11, 0
      %p57 = por %p55, %p56
      %p58 = scmp.ne.s32.totalorder %s47, %s50
      %p59 = scmp.eq.s32.totalorder %s16, 1
      %p60 = por %p58, %p59
      %p61 = scmp.ne.s32.totalorder %s50, %s51
      %p62 = scmp.eq.s32.totalorder %s16, 0
      %p63 = por %p61, %p62
      %p64 = scmp.ne.s32.totalorder %s50, %s51
      %p65 = scmp.eq.s32.totalorder %s17, 1
      %p66 = por %p64, %p65
      %p68 = scmp.ne.s32.totalorder %s51, %s67
      %p69 = scmp.eq.s32.totalorder %s17, 0
      %p70 = por %p68, %p69
      %s71 = ssub.s32 %s11, %s18
      %p72 = scmp.eq.s32.totalorder %s71, 0
      %s74 = sadd.s32 %s73, 1
      %s75 = scalar_select %p72, %s73, %s74
      %p78 = pneg %p72
      %p79 = scmp.eq.s32.totalorder %s11, 1
      %p80 = por %p78, %p79
      %p81 = scmp.ne.s32.totalorder %s73, %s76
      %p82 = scmp.eq.s32.totalorder %s11, 0
      %p83 = por %p81, %p82
      %p84 = scmp.ne.s32.totalorder %s73, %s76
      %p85 = scmp.eq.s32.totalorder %s16, 1
      %p86 = por %p84, %p85
      %p87 = scmp.ne.s32.totalorder %s76, %s77
      %p88 = scmp.eq.s32.totalorder %s16, 0
      %p89 = por %p87, %p88
      %p90 = scmp.ne.s32.totalorder %s76, %s77
      %p91 = scmp.eq.s32.totalorder %s17, 1
      %p92 = por %p90, %p91
      %p94 = scmp.ne.s32.totalorder %s77, %s93
      %p95 = scmp.eq.s32.totalorder %s17, 0
      %p96 = por %p94, %p95
      %p97 = scmp.le.s32.totalorder 1, %s11
      %p98 = scmp.lt.s32.totalorder %s11, 3
      %p99 = pnand %p97, %p98
      %p100 = pneg %p99
      // Predicated region
      $region9: #{tpu_custom_call.1} parent=5 // pred_check
        _
      $region10: #{tpu_custom_call.1} parent=5 // pred_check_branch
        %102 = sbr.rel (%p99) target = $region12
      $region11: #{tpu_custom_call.1} parent=5 // pred_region
        %s103 = ssub.s32 %s11, 1
      $region12: #{tpu_custom_call.1} parent=5 // pred_fallthru
        _
      %p104 = scmp.lt.s32.totalorder %s11, 2
      // Predicated region
      $region13: #{tpu_custom_call.1} parent=5 // pred_check
        %p105 = pneg %p104
      $region14: #{tpu_custom_call.1} parent=5 // pred_check_branch
        %107 = sbr.rel (%p105) target = $region16
      $region15: #{tpu_custom_call.1} parent=5 // pred_region
        // Predicated region
        $region17: #{tpu_custom_call.1} parent=15 // pred_check
          %p108 = pneg %p31
        $region18: #{tpu_custom_call.1} parent=15 // pred_check_branch
          %110 = sbr.rel (%p108) target = $region20
        $region19: #{tpu_custom_call.1} parent=15 // pred_region
          %p111 = scmp.lt.s32.totalorder %s11, 1
          %s112 = scalar_select %p111, %s11, 1
          %s113 = smul.addr %s112, 8
          %s114 = scalar_lea.vmem %s0, %s113
        $region20: #{tpu_custom_call.1} parent=15 // pred_fallthru
          _
        // Predicated region
        $region21: #{tpu_custom_call.1} parent=15 // pred_check
          %p115 = pneg %p57
        $region22: #{tpu_custom_call.1} parent=15 // pred_check_branch
          %117 = sbr.rel (%p115) target = $region24
        $region23: #{tpu_custom_call.1} parent=15 // pred_region
          %p118 = scmp.lt.s32.totalorder %s11, 1
          %s119 = scalar_select %p118, %s11, 1
          %s120 = smul.addr %s119, 4
          %s121 = scalar_lea.vmem %s1, %s120
        $region24: #{tpu_custom_call.1} parent=15 // pred_fallthru
          _
      $region16: #{tpu_custom_call.1} parent=5 // pred_fallthru
        _
      %p122 = scmp.le.s32.totalorder 1, %s11
      %p123 = scmp.lt.s32.totalorder %s11, 3
      %p124 = pnand %p122, %p123
      %p125 = pneg %p124
      // Predicated region
      $region25: #{tpu_custom_call.1} parent=5 // pred_check
        _
      $region26: #{tpu_custom_call.1} parent=5 // pred_check_branch
        %127 = sbr.rel (%p124) target = $region28
      $region27: #{tpu_custom_call.1} parent=5 // pred_region
        %s128 = ssub.s32 %s11, 1
        %p129 = scmp.lt.s32.totalorder %s16, 1
        %s130 = scalar_select %p129, %s16, 1
        %s131 = smul.addr %s130, 8
        %s132 = scalar_lea.vmem %s0, %s131
        %p133 = pneg %p37
        %p134 = pneg %p34
        %p135 = scmp.lt.s32.totalorder %s16, 1
        %s136 = scalar_select %p135, %s16, 1
        %s137 = smul.addr %s136, 4
        %s138 = scalar_lea.vmem %s1, %s137
        %p139 = pneg %p63
        %p140 = pneg %p60
        %p141 = pneg %p89
        %p142 = pneg %p86
        %s143 = sand.u32 %s76, 1
        %s144 = scalar_lea.sflag [#allocation3], %s143
        %s145 = sand.u32 %s76, 1
        %s146 = smul.addr %s145, 8
        %s147 = scalar_lea.vmem [#allocation2], %s146
        %p148 = scmp.lt.s32.totalorder %s16, 1
        %s149 = scalar_select %p148, %s16, 1
        %s150 = smul.addr %s149, 8
        %s151 = scalar_lea.vmem %s0, %s150
        %p152 = scmp.lt.s32.totalorder %s16, 1
        %s153 = scalar_select %p152, %s16, 1
        %s154 = smul.addr %s153, 4
        %s155 = scalar_lea.vmem %s1, %s154
        %v156 = vld [vmem:[%s151] sm:$0xff]
        %v157 = vld [vmem:[%s155] sm:$0x7]
        %v158 = vmul.f32 %v156, %v156
        %vm159 = vcmask 23552
        %v160 = vsel %vm159, %v158, 0.0
        %161 = vadd.xlane.f32.xlu0 %v160
        %v162 = vpop.xlane.xlu0 %161
        %v163 = vmul.f32 %v157, %v157
        %vm164 = vcmask 124928
        %v165 = vsel %vm164, %v163, 0.0
        %v166 = vrot.slane %v165, 4
        %v167 = vadd.f32 %v165, %v166
        %v168 = vrot.slane %v167, 2
        %v169 = vadd.f32 %v167, %v168
        %v170 = vrot.slane %v169, 1
        %v171 = vadd.f32 %v169, %v170
        %173 = vset.pattern.permute.xlu0 0
        %174 = vperm.xlu0 %173, %v156
        %v175 = vpop.permute.xlu0 %174
        %v177 = vlaneseq
        %v178 = vshrl.u32 %v177, 7
        %v179 = vsub.s32 0, %v178
        %v180 = vrot.slane %v157, %v179
        %v181 = vmul.f32 %v175, %v180
        %182 = vset.pattern.permute.xlu0 1
        %183 = vperm.xlu0 %182, %v156
        %v184 = vpop.permute.xlu0 %183
        %v186 = vlaneseq
        %v187 = vshrl.u32 %v186, 7
        %v188 = vsub.s32 1, %v187
        %v189 = vrot.slane %v157, %v188
        %v190 = vmul.f32 %v184, %v189
        %v191 = vadd.f32 %v181, %v190
        %192 = vset.pattern.permute.xlu0 2
        %193 = vperm.xlu0 %192, %v156
        %v194 = vpop.permute.xlu0 %193
        %v196 = vlaneseq
        %v197 = vshrl.u32 %v196, 7
        %v198 = vsub.s32 2, %v197
        %v199 = vrot.slane %v157, %v198
        %v200 = vmul.f32 %v194, %v199
        %v201 = vadd.f32 %v191, %v200
        %v202 = vadd.f32 %v162, %v171
        %v203 = vmul.f32 %v201, 2.0
        %v204 = vsub.f32 %v202, %v203
        %v205 = vmax.f32 %v204, 0.0
        %vm206 = vcmask 130048
        %207 = vst.msk [vmem:[%s147] sm:$0xff] %vm206, %v205
        %s208 = sand.u32 %s76, 1
        %s209 = scalar_lea.sflag [#allocation3], %s208
        %s210 = sand.u32 %s76, 1
        %s211 = smul.addr %s210, 8
        %s212 = scalar_lea.vmem [#allocation2], %s211
        // Predicated region
        $region29: #{tpu_custom_call.1} parent=27 // pred_check
          %p213 = pneg %p86
        $region30: #{tpu_custom_call.1} parent=27 // pred_check_branch
          %215 = sbr.rel (%p213) target = $region32
        $region31: #{tpu_custom_call.1} parent=27 // pred_region
          %s217 = ssub.s32 128, 128
          %218 = vsyncadd %s209, %s217
          %s219 = smul.addr %s16, 128
          %s220 = scalar_lea.hbm %s2, %s219
          %s222 = sshll.u32 %s212, 4
          %s223 = int_to_ptr.vmem [resolvable:$true] %s222
          %225 = dma.vmem_to_hbm [thread:$0]  %s223, 128, %s220, %s209
        $region32: #{tpu_custom_call.1} parent=27 // pred_fallthru
          _
      $region28: #{tpu_custom_call.1} parent=5 // pred_fallthru
        _
      %p226 = scmp.le.s32.totalorder 2, %s11
      // Predicated region
      $region33: #{tpu_custom_call.1} parent=5 // pred_check
        %p227 = pneg %p226
      $region34: #{tpu_custom_call.1} parent=5 // pred_check_branch
        %229 = sbr.rel (%p227) target = $region36
      $region35: #{tpu_custom_call.1} parent=5 // pred_region
        %s230 = ssub.s32 %s11, 2
        // Predicated region
        $region37: #{tpu_custom_call.1} parent=35 // pred_check
          %p231 = pneg %p92
        $region38: #{tpu_custom_call.1} parent=35 // pred_check_branch
          %233 = sbr.rel (%p231) target = $region40
        $region39: #{tpu_custom_call.1} parent=35 // pred_region
          %s234 = sand.u32 %s77, 1
          %s235 = scalar_lea.sflag [#allocation3], %s234
          %s236 = sand.u32 %s77, 1
          %s237 = smul.addr %s236, 8
          %s238 = scalar_lea.vmem [#allocation2], %s237
          %239 = dma.done %s235, 128
        $region40: #{tpu_custom_call.1} parent=35 // pred_fallthru
          _
      $region36: #{tpu_custom_call.1} parent=5 // pred_fallthru
        _
    $region6: #{tpu_custom_call.1} parent=1 // loop_footer
      %s15 = sadd.s32 1, %s11
    $region7: #{tpu_custom_call.1} parent=1 // loop_footer_branch
      %10 = sbr.rel target = $region3
    $region8: #{tpu_custom_call.1} parent=1 // loop_exit
      _
    %240 = vsyncpa [#allocation3], 1
    %s241 = scalar_lea.sflag [#allocation3], 1
    %242 = vsyncpa %s241, 1

</llo_original>
